<compile_context>
chip_gen: v7x
topology: tpu7x:2x2x1
jax: 0.10.0
libtpu: 0.0.40
codegen_flags: <defaults>
</compile_context>

<pallas_src>
import functools

import jax
import jax.numpy as jnp
from jax.experimental import pallas as pl
from jax.experimental.pallas import tpu as pltpu

_LANE = 128        # lane (last-dim) multiple: dense unmasked stores + full MXU tiles
_ROW_ALIGN = 16    # batch-row multiple (bf16 sublane packing; also multiple of f32's 8)
_MAX_TILE_B = 512  # upper bound on rows per grid step


def _round_up(n, m):
    return ((n + m - 1) // m) * m


def _vmem_limit_bytes():
    """Generation-aware VMEM cap: ~75% of physical (96 MiB v5e/v6e, 48 MiB v7x)."""
    try:
        cap = int(pltpu.get_tpu_info().vmem_capacity_bytes)
    except Exception:
        cap = 64 * 1024 * 1024
    return min(cap * 3 // 4, 100 * 1024 * 1024)


_VMEM_LIMIT = _vmem_limit_bytes()


# ----------------------------------------------------------------------------
# Fused MLP kernel (one batch tile per grid step).
#   refs = (x, w_0 .. w_{L-1}, out_0 .. out_{L-1})
# Weights arrive pre-transposed/padded to (K_pad, N_pad) in the compute dtype,
# so each layer is a single straight x @ w on the MXU.  Only the Linear
# pre-activation is stored; ReLU outputs are recomputed by the consumer.
# ----------------------------------------------------------------------------
def _fused_mlp_kernel(*refs, n_layers, compute_dtype):
    x_ref = refs[0]
    w_refs = refs[1:1 + n_layers]
    out_refs = refs[1 + n_layers:]

    h = x_ref[...].astype(compute_dtype)
    for li in range(n_layers):
        pre = jnp.dot(h, w_refs[li][...], preferred_element_type=jnp.float32)
        out_refs[li][...] = pre.astype(out_refs[li].dtype)
        if li != n_layers - 1:
            h = jnp.maximum(pre, 0.0).astype(compute_dtype)


def _choose_tile_b(batch, dims_p, weight_bytes):
    """Largest batch tile (<=512, multiple of 16) whose double-buffered x/output
    tiles plus (conservatively double-buffered) weights fit the VMEM budget."""
    per_row = 2 * 4 * sum(dims_p)                       # f32 x-tile + all output tiles, x2 buffers
    budget = max(int(_VMEM_LIMIT * 0.8) - 2 * weight_bytes, per_row * _ROW_ALIGN)
    tile_b = min(_MAX_TILE_B, _round_up(batch, _ROW_ALIGN), max(budget // per_row, _ROW_ALIGN))
    return max((tile_b // _ROW_ALIGN) * _ROW_ALIGN, _ROW_ALIGN)


def _fused_forward(x_pad, wt_pads, dims_p, batch_p, tile_b, out_dtype):
    n_layers = len(wt_pads)
    compute_dtype = wt_pads[0].dtype

    in_specs = [pl.BlockSpec((tile_b, dims_p[0]), lambda i: (i, 0))]
    for li in range(n_layers):
        in_specs.append(pl.BlockSpec((dims_p[li], dims_p[li + 1]), lambda i: (0, 0)))

    out_specs = tuple(
        pl.BlockSpec((tile_b, dims_p[li + 1]), lambda i: (i, 0)) for li in range(n_layers)
    )
    out_shapes = tuple(
        jax.ShapeDtypeStruct((batch_p, dims_p[li + 1]), out_dtype) for li in range(n_layers)
    )

    kernel = functools.partial(
        _fused_mlp_kernel, n_layers=n_layers, compute_dtype=compute_dtype
    )
    return pl.pallas_call(
        kernel,
        out_shape=out_shapes,
        grid=(batch_p // tile_b,),
        in_specs=in_specs,
        out_specs=out_specs,
        compiler_params=pltpu.CompilerParams(
            dimension_semantics=("parallel",),          # megacore sharding on v7x
            vmem_limit_bytes=_VMEM_LIMIT,
        ),
    )(x_pad, *wt_pads)


# ----------------------------------------------------------------------------
# Parameter prep (one-time, hoisted out of the per-call forward).
# torch-style weights are (out_features, in_features); we transpose once to
# (in, out), zero-pad both dims to multiples of 128 and cast to compute_dtype.
# ----------------------------------------------------------------------------
def prepare_fcnn_params(weights, compute_dtype=jnp.bfloat16):
    dims = (int(weights[0].shape[1]),) + tuple(int(w.shape[0]) for w in weights)
    dims_p = tuple(_round_up(d, _LANE) for d in dims)
    wt_pads = []
    for li, w in enumerate(weights):
        n, k = w.shape
        wt = jnp.zeros((dims_p[li], dims_p[li + 1]), compute_dtype)
        wt = wt.at[:k, :n].set(w.T.astype(compute_dtype))
        wt_pads.append(wt)
    return tuple(wt_pads), dims


def init_fcnn_params(key, topology, dtype=jnp.float32):
    """Deterministic torch-like init: U(-1/sqrt(fan_in), 1/sqrt(fan_in)),
    weight shape (out_features, in_features), bias=False."""
    weights = []
    for fan_in, fan_out in zip(topology[:-1], topology[1:]):
        key, sub = jax.random.split(key)
        bound = 1.0 / jnp.sqrt(jnp.asarray(fan_in, dtype))
        w = jax.random.uniform(
            sub, (int(fan_out), int(fan_in)), dtype=dtype, minval=-bound, maxval=bound
        )
        weights.append(w)
    return weights


# ----------------------------------------------------------------------------
# fcnnClassifierModule forward (dropout == 0.0 / erase_dropout() path):
#   Linear -> ReLU -> ... -> Linear  (bias=False everywhere).
# Returns (output, intermediate_outputs) where intermediate_outputs is a dict
# keyed by module index string, exactly as IntermediateSequential produces.
# ----------------------------------------------------------------------------
@functools.partial(jax.jit, static_argnums=(2,))
def fcnn_classifier_forward(inst_batch, wt_pads, dims):
    n_layers = len(wt_pads)
    dtype = inst_batch.dtype
    batch, in_dim = inst_batch.shape

    dims_p = tuple(_round_up(d, _LANE) for d in dims)
    weight_bytes = sum(int(w.size) * w.dtype.itemsize for w in wt_pads)
    tile_b = _choose_tile_b(batch, dims_p, weight_bytes)
    batch_p = _round_up(batch, tile_b)

    # Zero-pad the input once (exact through the whole Linear/ReLU chain).
    x_pad = jnp.zeros((batch_p, dims_p[0]), dtype).at[:batch, :in_dim].set(inst_batch)

    outs_pad = _fused_forward(x_pad, wt_pads, dims_p, batch_p, tile_b, jnp.float32)

    # Rebuild IntermediateSequential's {module_idx: output} dict.  Only the
    # Linear pre-activations came from HBM; ReLU outputs are recomputed here
    # (fused by XLA with the un-padding slice).
    intermediate_outputs = {}
    module_idx = 0
    last = None
    for li in range(n_layers):
        n = dims[li + 1]
        pre = outs_pad[li][:batch, :n].astype(dtype)
        intermediate_outputs[str(module_idx)] = pre
        module_idx += 1
        if li != n_layers - 1:
            post = jnp.maximum(pre, 0.0)
            intermediate_outputs[str(module_idx)] = post
            module_idx += 1
            last = post
        else:
            last = pre
    return last, intermediate_outputs


# TODO(synk): nn.Dropout (dropout > 0.0) is not implemented; this mirrors the
# dropout=0.0 / erase_dropout() configuration of the module.


# ----------------------------------------------------------------------------
# Demo / self-test
# ----------------------------------------------------------------------------
if __name__ == "__main__":
    key = jax.random.PRNGKey(0)
    k_in, k_w = jax.random.split(key)

    topology = [32, 64, 48, 16]   # in -> hidden -> hidden -> classes
    batch = 8

    inst_batch = jax.random.normal(k_in, (batch, topology[0]), dtype=jnp.float32)
    weights = init_fcnn_params(k_w, topology)

    # Pure-JAX f32 reference of the forward semantics (including intermediates).
    h = inst_batch
    ref_inter = {}
    midx = 0
    for li, w in enumerate(weights):
        h = h @ w.T
        ref_inter[str(midx)] = h
        midx += 1
        if li != len(weights) - 1:
            h = jnp.maximum(h, 0.0)
            ref_inter[str(midx)] = h
            midx += 1
    ref_out = h

    # --- Fast path: bf16 MXU operands, f32 accumulation (default) -----------
    wt_bf16, dims = prepare_fcnn_params(weights, compute_dtype=jnp.bfloat16)
    out_bf, inter_bf = fcnn_classifier_forward(inst_batch, wt_bf16, dims)
    out_bf = jax.block_until_ready(out_bf)
    jax.block_until_ready(inter_bf)

    assert out_bf.shape == (batch, topology[-1])
    assert len(inter_bf) == 2 * (len(weights) - 1) + 1
    assert jnp.allclose(out_bf, ref_out, atol=3e-2, rtol=3e-2)
    for name, ref_v in ref_inter.items():
        assert jnp.allclose(inter_bf[name], ref_v, atol=3e-2, rtol=3e-2), name
    assert jnp.allclose(inter_bf[str(2 * len(weights) - 2)], out_bf)

    # --- Exactness path: f32 operands, tight tolerance vs f32 reference -----
    wt_f32, dims = prepare_fcnn_params(weights, compute_dtype=jnp.float32)
    out_f32, inter_f32 = fcnn_classifier_forward(inst_batch, wt_f32, dims)
    out_f32 = jax.block_until_ready(out_f32)
    jax.block_until_ready(inter_f32)

    assert jnp.allclose(out_f32, ref_out, atol=1e-5, rtol=1e-5)
    for name, ref_v in ref_inter.items():
        assert jnp.allclose(inter_f32[name], ref_v, atol=1e-5, rtol=1e-5), name

    print("KERNEL_OK")
</pallas_src>

<mosaic_0001>
module attributes {stable_mosaic.version = 11 : i64} {
  func.func @_fused_mlp_kernel(%arg0: i32, %arg1: memref<16x128xf32, #tpu.memory_space<vmem>>, %arg2: memref<128x128xbf16, #tpu.memory_space<vmem>>, %arg3: memref<128x128xbf16, #tpu.memory_space<vmem>>, %arg4: memref<128x128xbf16, #tpu.memory_space<vmem>>, %arg5: memref<16x128xf32, #tpu.memory_space<vmem>>, %arg6: memref<16x128xf32, #tpu.memory_space<vmem>>, %arg7: memref<16x128xf32, #tpu.memory_space<vmem>>) attributes {dimension_semantics = [#tpu.dimension_semantics<parallel>], iteration_bounds = array<i64: 1>, scalar_prefetch = 0 : i64, scratch_operands = 0 : i64, tpu.core_type = #tpu.core_type<tc>, window_params = [{transform_indices = @transform_0, window_bounds = array<i64: 16, 128>}, {pipeline_mode = #tpu.pipeline_mode<synchronous>, transform_indices = @transform_1, window_bounds = array<i64: 128, 128>}, {pipeline_mode = #tpu.pipeline_mode<synchronous>, transform_indices = @transform_2, window_bounds = array<i64: 128, 128>}, {pipeline_mode = #tpu.pipeline_mode<synchronous>, transform_indices = @transform_3, window_bounds = array<i64: 128, 128>}, {transform_indices = @transform_4, window_bounds = array<i64: 16, 128>}, {transform_indices = @transform_5, window_bounds = array<i64: 16, 128>}, {transform_indices = @transform_6, window_bounds = array<i64: 16, 128>}]} {
    %c0 = arith.constant 0 : index
    %c0_0 = arith.constant 0 : index
    %0 = vector.load %arg1[%c0, %c0_0] : memref<16x128xf32, #tpu.memory_space<vmem>>, vector<16x128xf32>
    %1 = arith.truncf %0 : vector<16x128xf32> to vector<16x128xbf16>
    %c0_1 = arith.constant 0 : index
    %c0_2 = arith.constant 0 : index
    %2 = vector.load %arg2[%c0_1, %c0_2] : memref<128x128xbf16, #tpu.memory_space<vmem>>, vector<128x128xbf16>
    %cst = arith.constant dense<0.000000e+00> : vector<16x128xf32>
    %3 = tpu.matmul %1, %2, %cst {dimension_numbers = #tpu.dot_dimension_numbers<[1], [0], [0], [1], [0, 0, 1, 1], [], []>} : vector<16x128xbf16>, vector<128x128xbf16>, vector<16x128xf32> -> vector<16x128xf32>
    %c0_3 = arith.constant 0 : index
    %c0_4 = arith.constant 0 : index
    %4 = vector.load %arg5[%c0_3, %c0_4] : memref<16x128xf32, #tpu.memory_space<vmem>>, vector<16x128xf32>
    tpu.vector_store %arg5[%c0_3, %c0_4], %3 {strides = array<i32>} : memref<16x128xf32, #tpu.memory_space<vmem>>, vector<16x128xf32>,
    %cst_5 = arith.constant 0.000000e+00 : f32
    %5 = vector.broadcast %cst_5 : f32 to vector<16x128xf32>
    %6 = arith.maximumf %3, %5 : vector<16x128xf32>
    %7 = arith.truncf %6 : vector<16x128xf32> to vector<16x128xbf16>
    %c0_6 = arith.constant 0 : index
    %c0_7 = arith.constant 0 : index
    %8 = vector.load %arg3[%c0_6, %c0_7] : memref<128x128xbf16, #tpu.memory_space<vmem>>, vector<128x128xbf16>
    %cst_8 = arith.constant dense<0.000000e+00> : vector<16x128xf32>
    %9 = tpu.matmul %7, %8, %cst_8 {dimension_numbers = #tpu.dot_dimension_numbers<[1], [0], [0], [1], [0, 0, 1, 1], [], []>} : vector<16x128xbf16>, vector<128x128xbf16>, vector<16x128xf32> -> vector<16x128xf32>
    %c0_9 = arith.constant 0 : index
    %c0_10 = arith.constant 0 : index
    %10 = vector.load %arg6[%c0_9, %c0_10] : memref<16x128xf32, #tpu.memory_space<vmem>>, vector<16x128xf32>
    tpu.vector_store %arg6[%c0_9, %c0_10], %9 {strides = array<i32>} : memref<16x128xf32, #tpu.memory_space<vmem>>, vector<16x128xf32>,
    %cst_11 = arith.constant 0.000000e+00 : f32
    %11 = vector.broadcast %cst_11 : f32 to vector<16x128xf32>
    %12 = arith.maximumf %9, %11 : vector<16x128xf32>
    %13 = arith.truncf %12 : vector<16x128xf32> to vector<16x128xbf16>
    %c0_12 = arith.constant 0 : index
    %c0_13 = arith.constant 0 : index
    %14 = vector.load %arg4[%c0_12, %c0_13] : memref<128x128xbf16, #tpu.memory_space<vmem>>, vector<128x128xbf16>
    %cst_14 = arith.constant dense<0.000000e+00> : vector<16x128xf32>
    %15 = tpu.matmul %13, %14, %cst_14 {dimension_numbers = #tpu.dot_dimension_numbers<[1], [0], [0], [1], [0, 0, 1, 1], [], []>} : vector<16x128xbf16>, vector<128x128xbf16>, vector<16x128xf32> -> vector<16x128xf32>
    %c0_15 = arith.constant 0 : index
    %c0_16 = arith.constant 0 : index
    %16 = vector.load %arg7[%c0_15, %c0_16] : memref<16x128xf32, #tpu.memory_space<vmem>>, vector<16x128xf32>
    tpu.vector_store %arg7[%c0_15, %c0_16], %15 {strides = array<i32>} : memref<16x128xf32, #tpu.memory_space<vmem>>, vector<16x128xf32>,
    return
  }
  func.func @transform_0(%arg0: i32) -> (i32, i32) {
    %c0_i32 = arith.constant 0 : i32
    %c0_i32_0 = arith.constant 0 : i32
    return %arg0, %c0_i32 : i32, i32
  }
  func.func @transform_1(%arg0: i32) -> (i32, i32) {
    %c0_i32 = arith.constant 0 : i32
    %c0_i32_0 = arith.constant 0 : i32
    %c0_i32_1 = arith.constant 0 : i32
    return %c0_i32, %c0_i32_0 : i32, i32
  }
  func.func @transform_2(%arg0: i32) -> (i32, i32) {
    %c0_i32 = arith.constant 0 : i32
    %c0_i32_0 = arith.constant 0 : i32
    %c0_i32_1 = arith.constant 0 : i32
    return %c0_i32, %c0_i32_0 : i32, i32
  }
  func.func @transform_3(%arg0: i32) -> (i32, i32) {
    %c0_i32 = arith.constant 0 : i32
    %c0_i32_0 = arith.constant 0 : i32
    %c0_i32_1 = arith.constant 0 : i32
    return %c0_i32, %c0_i32_0 : i32, i32
  }
  func.func @transform_4(%arg0: i32) -> (i32, i32) {
    %c0_i32 = arith.constant 0 : i32
    %c0_i32_0 = arith.constant 0 : i32
    return %arg0, %c0_i32 : i32, i32
  }
  func.func @transform_5(%arg0: i32) -> (i32, i32) {
    %c0_i32 = arith.constant 0 : i32
    %c0_i32_0 = arith.constant 0 : i32
    return %arg0, %c0_i32 : i32, i32
  }
  func.func @transform_6(%arg0: i32) -> (i32, i32) {
    %c0_i32 = arith.constant 0 : i32
    %c0_i32_0 = arith.constant 0 : i32
    return %arg0, %c0_i32 : i32, i32
  }
}

</mosaic_0001>

<llo_original>
// kernel: fcnn_classifier_forward.1
$region0: #{fcnn_classifier_forward.1}
  #allocation0 [shape = 'u32[]', space=smem, size = 0x4, offset = 0x4, fixed_abs, tag = 'smem constant byte address 0x4 - core index']
  #allocation1 [shape = 'u32[144,128]{1,0:T(1,128)}', space=vmem, size = 0x12000, scoped, tag = 'internal scratch']
  %s0 = inlined_call_operand.vmem [shape: f32[16,128], index: 0, kind: input, shape index: {}]
  %s1 = inlined_call_operand.hbm [shape: bf16[128,128], index: 1, kind: input, shape index: {}]
  %s2 = inlined_call_operand.hbm [shape: bf16[128,128], index: 2, kind: input, shape index: {}]
  %s3 = inlined_call_operand.hbm [shape: bf16[128,128], index: 3, kind: input, shape index: {}]
  %s4 = inlined_call_operand.vmem [shape: f32[16,128], index: 4, kind: output, shape index: {0}]
  %s5 = inlined_call_operand.vmem [shape: f32[16,128], index: 5, kind: output, shape index: {1}]
  %s6 = inlined_call_operand.vmem [shape: f32[16,128], index: 6, kind: output, shape index: {2}]
  %7 = xla_tuple %s4, %s5, %s6
  %s8 = sld [smem:[#allocation0]]
  $region54: #{fcnn_classifier_forward.1} parent=0
    _
  %s10 = ssub.s32 1, %s8
  %s11 = scalar_select 0, %s10, %s8
  $region1: #{fcnn_classifier_forward.1} parent=0
    #allocation2 [shape = 'u8[32768]{0}', space=vmem, size = 0x8000, scoped, tag = 'input window, operand 1, single buffered']
    #allocation3 [shape = 's32[1]{0}', space=sflag, size = 0x4, scoped, tag = 'scoped memory for fcnn_classifier_forward.1']
    #allocation4 [shape = 'u8[32768]{0}', space=vmem, size = 0x8000, scoped, tag = 'input window, operand 2, single buffered']
    #allocation5 [shape = 's32[1]{0}', space=sflag, size = 0x4, scoped, tag = 'scoped memory for fcnn_classifier_forward.1']
    #allocation6 [shape = 'u8[32768]{0}', space=vmem, size = 0x8000, scoped, tag = 'input window, operand 3, single buffered']
    %12 = vsyncpa [#allocation3], 0
    %13 = vsyncpa [#allocation5], 0
    // Predicated region
    $region2: #{fcnn_classifier_forward.1} parent=1 // pred_check
      _
    $region3: #{fcnn_classifier_forward.1} parent=1 // pred_check_branch
      %15 = sbr.rel (0) target = $region5
    $region4: #{fcnn_classifier_forward.1} parent=1 // pred_region
      _
    $region5: #{fcnn_classifier_forward.1} parent=1 // pred_fallthru
      _
    // Predicated region
    $region6: #{fcnn_classifier_forward.1} parent=1 // pred_check
      _
    $region7: #{fcnn_classifier_forward.1} parent=1 // pred_check_branch
      %17 = sbr.rel (0) target = $region9
    $region8: #{fcnn_classifier_forward.1} parent=1 // pred_region
      %s19 = ssub.s32 1024, 1024
      %20 = vsyncadd [#allocation3], %s19
      %s21 = sshll.u32 [#allocation2], 4
      %s22 = int_to_ptr.vmem [resolvable:$true] %s21
      %27 = dma.hbm_to_vmem [thread:$0]  %s1, 1024, %s22, [#allocation3], 64, 64, 4
    $region9: #{fcnn_classifier_forward.1} parent=1 // pred_fallthru
      _
    // Predicated region
    $region10: #{fcnn_classifier_forward.1} parent=1 // pred_check
      _
    $region11: #{fcnn_classifier_forward.1} parent=1 // pred_check_branch
      %29 = sbr.rel (0) target = $region13
    $region12: #{fcnn_classifier_forward.1} parent=1 // pred_region
      %s31 = ssub.s32 1024, 1024
      %32 = vsyncadd [#allocation5], %s31
      %s33 = sshll.u32 [#allocation4], 4
      %s34 = int_to_ptr.vmem [resolvable:$true] %s33
      %39 = dma.hbm_to_vmem [thread:$0]  %s2, 1024, %s34, [#allocation5], 64, 64, 4
    $region13: #{fcnn_classifier_forward.1} parent=1 // pred_fallthru
      _
    // Predicated region
    $region14: #{fcnn_classifier_forward.1} parent=1 // pred_check
      _
    $region15: #{fcnn_classifier_forward.1} parent=1 // pred_check_branch
      %41 = sbr.rel (0) target = $region17
    $region16: #{fcnn_classifier_forward.1} parent=1 // pred_region
      %s43 = ssub.s32 1024, 1024
      %44 = vsyncadd [#allocation5], %s43
      %s45 = sshll.u32 [#allocation6], 4
      %s46 = int_to_ptr.vmem [resolvable:$true] %s45
      %51 = dma.hbm_to_vmem [thread:$0]  %s3, 1024, %s46, [#allocation5], 64, 64, 4
    $region17: #{fcnn_classifier_forward.1} parent=1 // pred_fallthru
      _
    // Predicated region
    $region18: #{fcnn_classifier_forward.1} parent=1 // pred_check
      _
    $region19: #{fcnn_classifier_forward.1} parent=1 // pred_check_branch
      %53 = sbr.rel (0) target = $region21
    $region20: #{fcnn_classifier_forward.1} parent=1 // pred_region
      %54 = dma.done [#allocation3], 1024
    $region21: #{fcnn_classifier_forward.1} parent=1 // pred_fallthru
      _
    // Predicated region
    $region22: #{fcnn_classifier_forward.1} parent=1 // pred_check
      _
    $region23: #{fcnn_classifier_forward.1} parent=1 // pred_check_branch
      %56 = sbr.rel (0) target = $region25
    $region24: #{fcnn_classifier_forward.1} parent=1 // pred_region
      %57 = dma.done [#allocation5], 1024
    $region25: #{fcnn_classifier_forward.1} parent=1 // pred_fallthru
      _
    // Predicated region
    $region26: #{fcnn_classifier_forward.1} parent=1 // pred_check
      _
    $region27: #{fcnn_classifier_forward.1} parent=1 // pred_check_branch
      %59 = sbr.rel (0) target = $region29
    $region28: #{fcnn_classifier_forward.1} parent=1 // pred_region
      %60 = dma.done [#allocation5], 1024
    $region29: #{fcnn_classifier_forward.1} parent=1 // pred_fallthru
      _
    %v62 = vld [vmem:[%s0] sm:$0xff]
    %v63 = vld [vmem:[%s0 + $0x8] sm:$0xff]
    %v64 = vpack.c.bf16 %v63, %v62
    %v65 = vld [vmem:[#allocation2] sm:$0xf]
    %v66 = vld [vmem:[#allocation2 + $0x4] sm:$0xf]
    %v67 = vld [vmem:[#allocation2 + $0x8] sm:$0xf]
    %v68 = vld [vmem:[#allocation2 + $0xc] sm:$0xf]
    %v69 = vld [vmem:[#allocation2 + $0x10] sm:$0xf]
    %v70 = vld [vmem:[#allocation2 + $0x14] sm:$0xf]
    %v71 = vld [vmem:[#allocation2 + $0x18] sm:$0xf]
    %v72 = vld [vmem:[#allocation2 + $0x1c] sm:$0xf]
    %v73 = vld [vmem:[#allocation2 + $0x20] sm:$0xf]
    %v74 = vld [vmem:[#allocation2 + $0x24] sm:$0xf]
    %v75 = vld [vmem:[#allocation2 + $0x28] sm:$0xf]
    %v76 = vld [vmem:[#allocation2 + $0x2c] sm:$0xf]
    %v77 = vld [vmem:[#allocation2 + $0x30] sm:$0xf]
    %v78 = vld [vmem:[#allocation2 + $0x34] sm:$0xf]
    %v79 = vld [vmem:[#allocation2 + $0x38] sm:$0xf]
    %v80 = vld [vmem:[#allocation2 + $0x3c] sm:$0xf]
    %v97 = vunpack.c.l.b16 %v65
    %v98 = vunpack.c.l.b16 %v66
    %v99 = vunpack.c.l.b16 %v67
    %v100 = vunpack.c.l.b16 %v68
    %v101 = vunpack.c.l.b16 %v69
    %v102 = vunpack.c.l.b16 %v70
    %v103 = vunpack.c.l.b16 %v71
    %v104 = vunpack.c.l.b16 %v72
    %v105 = vunpack.c.l.b16 %v73
    %v106 = vunpack.c.l.b16 %v74
    %v107 = vunpack.c.l.b16 %v75
    %v108 = vunpack.c.l.b16 %v76
    %v109 = vunpack.c.l.b16 %v77
    %v110 = vunpack.c.l.b16 %v78
    %v111 = vunpack.c.l.b16 %v79
    %v112 = vunpack.c.l.b16 %v80
    %v113 = vpack.c.b16 %v98, %v97
    %v114 = vpack.c.b16 %v100, %v99
    %v115 = vpack.c.b16 %v102, %v101
    %v116 = vpack.c.b16 %v104, %v103
    %v117 = vpack.c.b16 %v106, %v105
    %v118 = vpack.c.b16 %v108, %v107
    %v119 = vpack.c.b16 %v110, %v109
    %v120 = vpack.c.b16 %v112, %v111
    %129 = vmatprep.subr.bf16.mxu0 0
    %130 = vmatpush1.bf16.msra.mxu0 %v113
    %131 = vmatprep.subr.bf16.mxu0 0
    %132 = vmatpush1.bf16.msra.mxu0 %v114
    %133 = vmatprep.subr.bf16.mxu0 0
    %134 = vmatpush1.bf16.msra.mxu0 %v115
    %135 = vmatprep.subr.bf16.mxu0 0
    %136 = vmatpush1.bf16.msra.mxu0 %v116
    %137 = vmatprep.subr.bf16.mxu0 0
    %138 = vmatpush1.bf16.msra.mxu0 %v117
    %139 = vmatprep.subr.bf16.mxu0 0
    %140 = vmatpush1.bf16.msra.mxu0 %v118
    %141 = vmatprep.subr.bf16.mxu0 0
    %142 = vmatpush1.bf16.msra.mxu0 %v119
    %143 = vmatprep.subr.bf16.mxu0 0
    %144 = vmatpush1.bf16.msra.mxu0 %v120
    %145 = vmatprep.subr.bf16.mxu0 0
    %146 = vmatpush1.bf16.msra.mxu0 0
    %147 = vmatprep.subr.bf16.mxu0 0
    %148 = vmatpush1.bf16.msra.mxu0 0
    %149 = vmatprep.subr.bf16.mxu0 0
    %150 = vmatpush1.bf16.msra.mxu0 0
    %151 = vmatprep.subr.bf16.mxu0 0
    %152 = vmatpush1.bf16.msra.mxu0 0
    %153 = vmatprep.subr.bf16.mxu0 0
    %154 = vmatpush1.bf16.msra.mxu0 0
    %155 = vmatprep.subr.bf16.mxu0 0
    %156 = vmatpush1.bf16.msra.mxu0 0
    %157 = vmatprep.subr.bf16.mxu0 0
    %158 = vmatpush1.bf16.msra.mxu0 0
    %159 = vmatprep.subr.bf16.mxu0 0
    %160 = vmatpush1.bf16.msra.mxu0 0
    %161 = vmatprep.mubr.bf16.mxu0 0
    %162 = vmatmul.mubr.bf16.gmra.mrb[0].mxu0 %v64
    %v163 = vpop.f32.mrb[0].mxu0
    %v164 = vadd.f32 0.0, %v163
    %v165 = vpop.f32.mrb[0].mxu0
    %v166 = vpop.f32.mrb[0].mxu0
    %v167 = vadd.f32 0.0, %v166
    %v168 = vpop.f32.mrb[0].mxu0
    %169 = vdwg.mxu0
    %170 = vst [vmem:[%s4] sm:$0xff] %v164
    %171 = vst [vmem:[%s4 + $0x8] sm:$0xff] %v167
    %v172 = vmax.f32 %v164, 0.0
    %v173 = vmax.f32 %v167, 0.0
    %v174 = vpack.c.bf16 %v173, %v172
    %v175 = vld [vmem:[#allocation4] sm:$0xf]
    %v176 = vld [vmem:[#allocation4 + $0x4] sm:$0xf]
    %v177 = vld [vmem:[#allocation4 + $0x8] sm:$0xf]
    %v178 = vld [vmem:[#allocation4 + $0xc] sm:$0xf]
    %v179 = vld [vmem:[#allocation4 + $0x10] sm:$0xf]
    %v180 = vld [vmem:[#allocation4 + $0x14] sm:$0xf]
    %v181 = vld [vmem:[#allocation4 + $0x18] sm:$0xf]
    %v182 = vld [vmem:[#allocation4 + $0x1c] sm:$0xf]
    %v183 = vld [vmem:[#allocation4 + $0x20] sm:$0xf]
    %v184 = vld [vmem:[#allocation4 + $0x24] sm:$0xf]
    %v185 = vld [vmem:[#allocation4 + $0x28] sm:$0xf]
    %v186 = vld [vmem:[#allocation4 + $0x2c] sm:$0xf]
    %v187 = vld [vmem:[#allocation4 + $0x30] sm:$0xf]
    %v188 = vld [vmem:[#allocation4 + $0x34] sm:$0xf]
    %v189 = vld [vmem:[#allocation4 + $0x38] sm:$0xf]
    %v190 = vld [vmem:[#allocation4 + $0x3c] sm:$0xf]
    %v207 = vunpack.c.l.b16 %v175
    %v208 = vunpack.c.l.b16 %v176
    %v209 = vunpack.c.l.b16 %v177
    %v210 = vunpack.c.l.b16 %v178
    %v211 = vunpack.c.l.b16 %v179
    %v212 = vunpack.c.l.b16 %v180
    %v213 = vunpack.c.l.b16 %v181
    %v214 = vunpack.c.l.b16 %v182
    %v215 = vunpack.c.l.b16 %v183
    %v216 = vunpack.c.l.b16 %v184
    %v217 = vunpack.c.l.b16 %v185
    %v218 = vunpack.c.l.b16 %v186
    %v219 = vunpack.c.l.b16 %v187
    %v220 = vunpack.c.l.b16 %v188
    %v221 = vunpack.c.l.b16 %v189
    %v222 = vunpack.c.l.b16 %v190
    %v223 = vpack.c.b16 %v208, %v207
    %v224 = vpack.c.b16 %v210, %v209
    %v225 = vpack.c.b16 %v212, %v211
    %v226 = vpack.c.b16 %v214, %v213
    %v227 = vpack.c.b16 %v216, %v215
    %v228 = vpack.c.b16 %v218, %v217
    %v229 = vpack.c.b16 %v220, %v219
    %v230 = vpack.c.b16 %v222, %v221
    %239 = vmatprep.subr.bf16.mxu0 0
    %240 = vmatpush1.bf16.msra.mxu0 %v223
    %241 = vmatprep.subr.bf16.mxu0 0
    %242 = vmatpush1.bf16.msra.mxu0 %v224
    %243 = vmatprep.subr.bf16.mxu0 0
    %244 = vmatpush1.bf16.msra.mxu0 %v225
    %245 = vmatprep.subr.bf16.mxu0 0
    %246 = vmatpush1.bf16.msra.mxu0 %v226
    %247 = vmatprep.subr.bf16.mxu0 0
    %248 = vmatpush1.bf16.msra.mxu0 %v227
    %249 = vmatprep.subr.bf16.mxu0 0
    %250 = vmatpush1.bf16.msra.mxu0 %v228
    %251 = vmatprep.subr.bf16.mxu0 0
    %252 = vmatpush1.bf16.msra.mxu0 %v229
    %253 = vmatprep.subr.bf16.mxu0 0
    %254 = vmatpush1.bf16.msra.mxu0 %v230
    %255 = vmatprep.subr.bf16.mxu0 0
    %256 = vmatpush1.bf16.msra.mxu0 0
    %257 = vmatprep.subr.bf16.mxu0 0
    %258 = vmatpush1.bf16.msra.mxu0 0
    %259 = vmatprep.subr.bf16.mxu0 0
    %260 = vmatpush1.bf16.msra.mxu0 0
    %261 = vmatprep.subr.bf16.mxu0 0
    %262 = vmatpush1.bf16.msra.mxu0 0
    %263 = vmatprep.subr.bf16.mxu0 0
    %264 = vmatpush1.bf16.msra.mxu0 0
    %265 = vmatprep.subr.bf16.mxu0 0
    %266 = vmatpush1.bf16.msra.mxu0 0
    %267 = vmatprep.subr.bf16.mxu0 0
    %268 = vmatpush1.bf16.msra.mxu0 0
    %269 = vmatprep.subr.bf16.mxu0 0
    %270 = vmatpush1.bf16.msra.mxu0 0
    %271 = vmatprep.mubr.bf16.mxu0 0
    %272 = vmatmul.mubr.bf16.gmra.mrb[0].mxu0 %v174
    %v273 = vpop.f32.mrb[0].mxu0
    %v274 = vadd.f32 0.0, %v273
    %v275 = vpop.f32.mrb[0].mxu0
    %v276 = vpop.f32.mrb[0].mxu0
    %v277 = vadd.f32 0.0, %v276
    %v278 = vpop.f32.mrb[0].mxu0
    %279 = vdwg.mxu0
    %280 = vst [vmem:[%s5] sm:$0xff] %v274
    %281 = vst [vmem:[%s5 + $0x8] sm:$0xff] %v277
    %v282 = vmax.f32 %v274, 0.0
    %v283 = vmax.f32 %v277, 0.0
    %v284 = vpack.c.bf16 %v283, %v282
    %v285 = vld [vmem:[#allocation6] sm:$0xf]
    %v286 = vld [vmem:[#allocation6 + $0x4] sm:$0xf]
    %v287 = vld [vmem:[#allocation6 + $0x8] sm:$0xf]
    %v288 = vld [vmem:[#allocation6 + $0xc] sm:$0xf]
    %v289 = vld [vmem:[#allocation6 + $0x10] sm:$0xf]
    %v290 = vld [vmem:[#allocation6 + $0x14] sm:$0xf]
    %v291 = vld [vmem:[#allocation6 + $0x18] sm:$0xf]
    %v292 = vld [vmem:[#allocation6 + $0x1c] sm:$0xf]
    %v293 = vld [vmem:[#allocation6 + $0x20] sm:$0xf]
    %v294 = vld [vmem:[#allocation6 + $0x24] sm:$0xf]
    %v295 = vld [vmem:[#allocation6 + $0x28] sm:$0xf]
    %v296 = vld [vmem:[#allocation6 + $0x2c] sm:$0xf]
    %v297 = vld [vmem:[#allocation6 + $0x30] sm:$0xf]
    %v298 = vld [vmem:[#allocation6 + $0x34] sm:$0xf]
    %v299 = vld [vmem:[#allocation6 + $0x38] sm:$0xf]
    %v300 = vld [vmem:[#allocation6 + $0x3c] sm:$0xf]
    %v317 = vunpack.c.l.b16 %v285
    %v318 = vunpack.c.l.b16 %v286
    %v319 = vunpack.c.l.b16 %v287
    %v320 = vunpack.c.l.b16 %v288
    %v321 = vunpack.c.l.b16 %v289
    %v322 = vunpack.c.l.b16 %v290
    %v323 = vunpack.c.l.b16 %v291
    %v324 = vunpack.c.l.b16 %v292
    %v325 = vunpack.c.l.b16 %v293
    %v326 = vunpack.c.l.b16 %v294
    %v327 = vunpack.c.l.b16 %v295
    %v328 = vunpack.c.l.b16 %v296
    %v329 = vunpack.c.l.b16 %v297
    %v330 = vunpack.c.l.b16 %v298
    %v331 = vunpack.c.l.b16 %v299
    %v332 = vunpack.c.l.b16 %v300
    %v333 = vpack.c.b16 %v318, %v317
    %v334 = vpack.c.b16 %v320, %v319
    %v335 = vpack.c.b16 %v322, %v321
    %v336 = vpack.c.b16 %v324, %v323
    %v337 = vpack.c.b16 %v326, %v325
    %v338 = vpack.c.b16 %v328, %v327
    %v339 = vpack.c.b16 %v330, %v329
    %v340 = vpack.c.b16 %v332, %v331
    %349 = vmatprep.subr.bf16.mxu0 0
    %350 = vmatpush1.bf16.msra.mxu0 %v333
    %351 = vmatprep.subr.bf16.mxu0 0
    %352 = vmatpush1.bf16.msra.mxu0 %v334
    %353 = vmatprep.subr.bf16.mxu0 0
    %354 = vmatpush1.bf16.msra.mxu0 %v335
    %355 = vmatprep.subr.bf16.mxu0 0
    %356 = vmatpush1.bf16.msra.mxu0 %v336
    %357 = vmatprep.subr.bf16.mxu0 0
    %358 = vmatpush1.bf16.msra.mxu0 %v337
    %359 = vmatprep.subr.bf16.mxu0 0
    %360 = vmatpush1.bf16.msra.mxu0 %v338
    %361 = vmatprep.subr.bf16.mxu0 0
    %362 = vmatpush1.bf16.msra.mxu0 %v339
    %363 = vmatprep.subr.bf16.mxu0 0
    %364 = vmatpush1.bf16.msra.mxu0 %v340
    %365 = vmatprep.subr.bf16.mxu0 0
    %366 = vmatpush1.bf16.msra.mxu0 0
    %367 = vmatprep.subr.bf16.mxu0 0
    %368 = vmatpush1.bf16.msra.mxu0 0
    %369 = vmatprep.subr.bf16.mxu0 0
    %370 = vmatpush1.bf16.msra.mxu0 0
    %371 = vmatprep.subr.bf16.mxu0 0
    %372 = vmatpush1.bf16.msra.mxu0 0
    %373 = vmatprep.subr.bf16.mxu0 0
    %374 = vmatpush1.bf16.msra.mxu0 0
    %375 = vmatprep.subr.bf16.mxu0 0
    %376 = vmatpush1.bf16.msra.mxu0 0
    %377 = vmatprep.subr.bf16.mxu0 0
    %378 = vmatpush1.bf16.msra.mxu0 0
    %379 = vmatprep.subr.bf16.mxu0 0
    %380 = vmatpush1.bf16.msra.mxu0 0
    %381 = vmatprep.mubr.bf16.mxu0 0
    %382 = vmatmul.mubr.bf16.gmra.mrb[0].mxu0 %v284
    %v383 = vpop.f32.mrb[0].mxu0
    %v384 = vadd.f32 0.0, %v383
    %v385 = vpop.f32.mrb[0].mxu0
    %v386 = vpop.f32.mrb[0].mxu0
    %v387 = vadd.f32 0.0, %v386
    %v388 = vpop.f32.mrb[0].mxu0
    %389 = vdwg.mxu0
    %390 = vst [vmem:[%s6] sm:$0xff] %v384
    %391 = vst [vmem:[%s6 + $0x8] sm:$0xff] %v387
    // Predicated region
    $region30: #{fcnn_classifier_forward.1} parent=1 // pred_check
      _
    $region31: #{fcnn_classifier_forward.1} parent=1 // pred_check_branch
      %393 = sbr.rel (0) target = $region33
    $region32: #{fcnn_classifier_forward.1} parent=1 // pred_region
      _
    $region33: #{fcnn_classifier_forward.1} parent=1 // pred_fallthru
      _
    // Predicated region
    $region34: #{fcnn_classifier_forward.1} parent=1 // pred_check
      _
    $region35: #{fcnn_classifier_forward.1} parent=1 // pred_check_branch
      %395 = sbr.rel (0) target = $region37
    $region36: #{fcnn_classifier_forward.1} parent=1 // pred_region
      _
    $region37: #{fcnn_classifier_forward.1} parent=1 // pred_fallthru
      _
    // Predicated region
    $region38: #{fcnn_classifier_forward.1} parent=1 // pred_check
      _
    $region39: #{fcnn_classifier_forward.1} parent=1 // pred_check_branch
      %397 = sbr.rel (0) target = $region41
    $region40: #{fcnn_classifier_forward.1} parent=1 // pred_region
      _
    $region41: #{fcnn_classifier_forward.1} parent=1 // pred_fallthru
      _
    // Predicated region
    $region42: #{fcnn_classifier_forward.1} parent=1 // pred_check
      _
    $region43: #{fcnn_classifier_forward.1} parent=1 // pred_check_branch
      %399 = sbr.rel (0) target = $region45
    $region44: #{fcnn_classifier_forward.1} parent=1 // pred_region
      _
    $region45: #{fcnn_classifier_forward.1} parent=1 // pred_fallthru
      _
    // Predicated region
    $region46: #{fcnn_classifier_forward.1} parent=1 // pred_check
      _
    $region47: #{fcnn_classifier_forward.1} parent=1 // pred_check_branch
      %401 = sbr.rel (0) target = $region49
    $region48: #{fcnn_classifier_forward.1} parent=1 // pred_region
      _
    $region49: #{fcnn_classifier_forward.1} parent=1 // pred_fallthru
      _
    // Predicated region
    $region50: #{fcnn_classifier_forward.1} parent=1 // pred_check
      _
    $region51: #{fcnn_classifier_forward.1} parent=1 // pred_check_branch
      %403 = sbr.rel (0) target = $region53
    $region52: #{fcnn_classifier_forward.1} parent=1 // pred_region
      _
    $region53: #{fcnn_classifier_forward.1} parent=1 // pred_fallthru
      _
    %404 = vsyncpa [#allocation3], 1
    %405 = vsyncpa [#allocation5], 1

</llo_original>
